<compile_context>
chip_gen: v5e
topology: v5e:2x2
jax: 0.10.0
libtpu: 0.0.40
codegen_flags: <defaults>
</compile_context>

<pallas_src>
import functools

import jax
import jax.numpy as jnp
from jax.experimental import pallas as pl
from jax.experimental.pallas import tpu as pltpu

# ---- Model hyperparameters (small, TPU-tile friendly) ----
BATCH = 2
CLIP_EMBED_DIM = 128          # clip_embeddings_dim
CROSS_ATTN_DIM = 128          # cross_attention_dim
NUM_TOKENS = 4                # clip_extra_context_tokens
D_OUT = NUM_TOKENS * CROSS_ATTN_DIM
LN_EPS = 1e-5


def _image_proj_kernel(x_ref, w_ref, b_ref, gamma_ref, beta_ref, o_ref,
                       *, tokens_per_tile):
    # x_ref:     (B, CLIP_EMBED_DIM)                 f32 (cast to bf16 in-kernel)
    # w_ref:     (CLIP_EMBED_DIM, tokens_per_tile*C) bf16 (pre-cast, pre-transposed)
    # b_ref:     (1, tokens_per_tile*C)              f32
    # gamma_ref: (1, C)                              f32
    # beta_ref:  (1, C)                              f32
    # o_ref:     (B, tokens_per_tile*C)              f32 (lane-dense 2-D slab)
    C = CROSS_ATTN_DIM

    # Wide MXU matmul for this D_OUT tile, f32 accumulation.
    x = x_ref[...].astype(jnp.bfloat16)
    y = jnp.dot(x, w_ref[...], preferred_element_type=jnp.float32)
    y = y + b_ref[...]                                   # (B, tile_width), f32

    # Hoisted parameter broadcasts (outside the per-token loop).
    gamma = jnp.broadcast_to(gamma_ref[...], (BATCH, C))
    beta = jnp.broadcast_to(beta_ref[...], (BATCH, C))
    inv_c = jnp.float32(1.0 / C)

    # Per-token LayerNorm on 128-lane-aligned slices; single-pass statistics
    # (both reductions issued on yt), var = E[y^2] - mean^2 in f32.
    for t in range(tokens_per_tile):
        yt = y[:, t * C:(t + 1) * C]                     # (B, C) f32
        s1 = jnp.sum(yt, axis=-1, keepdims=True)
        s2 = jnp.sum(yt * yt, axis=-1, keepdims=True)
        mean = s1 * inv_c
        var = s2 * inv_c - mean * mean
        y_norm = (yt - mean) * jax.lax.rsqrt(var + LN_EPS)
        # Lane-aligned, unmasked store into the 2-D lane-dense output slab.
        o_ref[:, t * C:(t + 1) * C] = y_norm * gamma + beta


def prepare_params(w_t_f32, b, gamma, beta):
    """One-time parameter prep (outside the hot path): weight -> bf16."""
    return w_t_f32.astype(jnp.bfloat16), b, gamma, beta


def image_proj_model(image_embeds, w_t_bf16, b, gamma, beta,
                     *, tokens_per_tile=NUM_TOKENS):
    """image_embeds: (B, CLIP_EMBED_DIM) -> (B, NUM_TOKENS, CROSS_ATTN_DIM)."""
    assert NUM_TOKENS % tokens_per_tile == 0
    n_tile = tokens_per_tile * CROSS_ATTN_DIM
    grid = (NUM_TOKENS // tokens_per_tile,)

    cost = pl.CostEstimate(
        flops=2 * BATCH * CLIP_EMBED_DIM * D_OUT,
        transcendentals=BATCH * NUM_TOKENS,  # rsqrt per (batch, token)
        bytes_accessed=(CLIP_EMBED_DIM * D_OUT * 2        # W bf16
                        + BATCH * CLIP_EMBED_DIM * 4      # x f32
                        + D_OUT * 4                       # bias
                        + 2 * CROSS_ATTN_DIM * 4          # gamma/beta
                        + BATCH * D_OUT * 4))             # output

    kernel = functools.partial(_image_proj_kernel,
                               tokens_per_tile=tokens_per_tile)

    out_2d = pl.pallas_call(
        kernel,
        out_shape=jax.ShapeDtypeStruct((BATCH, D_OUT), jnp.float32),
        grid_spec=pltpu.PrefetchScalarGridSpec(
            num_scalar_prefetch=0,
            grid=grid,
            in_specs=[
                pl.BlockSpec((BATCH, CLIP_EMBED_DIM), lambda j: (0, 0)),
                pl.BlockSpec((CLIP_EMBED_DIM, n_tile), lambda j: (0, j)),
                pl.BlockSpec((1, n_tile), lambda j: (0, j)),
                pl.BlockSpec((1, CROSS_ATTN_DIM), lambda j: (0, 0)),
                pl.BlockSpec((1, CROSS_ATTN_DIM), lambda j: (0, 0)),
            ],
            out_specs=pl.BlockSpec((BATCH, n_tile), lambda j: (0, j)),
        ),
        compiler_params=pltpu.CompilerParams(
            # Independent D_OUT tiles -> megacore-shardable; no reduction axis.
            # For realistic sizes also set vmem_limit_bytes here (and halve the
            # N-tile on v7x vs v6e: 64 MiB physical VMEM per TC on v7x).
            dimension_semantics=("parallel",)),
        cost_estimate=cost,
    )(image_embeds, w_t_bf16, b, gamma, beta)

    # Free metadata reshape to the module's (B, tokens, C) output.
    return out_2d.reshape(BATCH, NUM_TOKENS, CROSS_ATTN_DIM)


def _reference(image_embeds, w_t, b, gamma, beta):
    y = image_embeds @ w_t + b                            # (B, D_OUT)
    y = y.reshape(-1, NUM_TOKENS, CROSS_ATTN_DIM)
    mean = jnp.mean(y, axis=-1, keepdims=True)
    var = jnp.mean((y - mean) ** 2, axis=-1, keepdims=True)
    y = (y - mean) / jnp.sqrt(var + LN_EPS)
    return y * gamma.reshape(1, 1, -1) + beta.reshape(1, 1, -1)


if __name__ == "__main__":
    key = jax.random.PRNGKey(0)
    k_x, k_w, k_b = jax.random.split(key, 3)

    # Deterministic synthetic parameters (shapes from the module's __init__).
    image_embeds = jax.random.normal(k_x, (BATCH, CLIP_EMBED_DIM), jnp.float32)
    # torch Linear weight is (D_OUT, CLIP_EMBED_DIM); store its transpose.
    w_t = jax.random.normal(k_w, (CLIP_EMBED_DIM, D_OUT), jnp.float32) * 0.02
    b = jax.random.normal(k_b, (1, D_OUT), jnp.float32) * 0.01
    gamma = jnp.ones((1, CROSS_ATTN_DIM), jnp.float32)    # LayerNorm weight init
    beta = jnp.zeros((1, CROSS_ATTN_DIM), jnp.float32)    # LayerNorm bias init

    # One-time weight cast, outside the hot path.
    params = prepare_params(w_t, b, gamma, beta)
    params = jax.block_until_ready(params)

    # tokens_per_tile=2 -> grid=(2,) exercises the D_OUT-tiled, pipelined path.
    fwd = jax.jit(functools.partial(image_proj_model, tokens_per_tile=2))
    out = fwd(image_embeds, *params)
    out = jax.block_until_ready(out)

    # Full f32 reference; looser tolerance because the kernel matmul runs in
    # bf16 (f32 accumulation, f32 LayerNorm).
    ref = _reference(image_embeds, w_t, b, gamma, beta)
    assert out.shape == (BATCH, NUM_TOKENS, CROSS_ATTN_DIM)
    assert jnp.allclose(out, ref, atol=3e-2, rtol=3e-2)

    print("KERNEL_OK")
</pallas_src>

<mosaic_0001>
module attributes {stable_mosaic.version = 11 : i64} {
  func.func @_image_proj_kernel(%arg0: i32, %arg1: memref<2x128xf32, #tpu.memory_space<vmem>>, %arg2: memref<128x256xbf16, #tpu.memory_space<vmem>>, %arg3: memref<1x256xf32, #tpu.memory_space<vmem>>, %arg4: memref<1x128xf32, #tpu.memory_space<vmem>>, %arg5: memref<1x128xf32, #tpu.memory_space<vmem>>, %arg6: memref<2x256xf32, #tpu.memory_space<vmem>>) attributes {dimension_semantics = [#tpu.dimension_semantics<parallel>], iteration_bounds = array<i64: 2>, scalar_prefetch = 0 : i64, scratch_operands = 0 : i64, tpu.core_type = #tpu.core_type<tc>, window_params = [{pipeline_mode = #tpu.pipeline_mode<synchronous>, transform_indices = @transform_0, window_bounds = array<i64: 2, 128>}, {transform_indices = @transform_1, window_bounds = array<i64: 128, 256>}, {transform_indices = @transform_2, window_bounds = array<i64: 1, 256>}, {pipeline_mode = #tpu.pipeline_mode<synchronous>, transform_indices = @transform_3, window_bounds = array<i64: 1, 128>}, {pipeline_mode = #tpu.pipeline_mode<synchronous>, transform_indices = @transform_4, window_bounds = array<i64: 1, 128>}, {transform_indices = @transform_5, window_bounds = array<i64: 2, 256>}]} {
    %c0 = arith.constant 0 : index
    %c0_0 = arith.constant 0 : index
    %0 = vector.load %arg1[%c0, %c0_0] : memref<2x128xf32, #tpu.memory_space<vmem>>, vector<2x128xf32>
    %1 = arith.truncf %0 : vector<2x128xf32> to vector<2x128xbf16>
    %c0_1 = arith.constant 0 : index
    %c0_2 = arith.constant 0 : index
    %2 = vector.load %arg2[%c0_1, %c0_2] : memref<128x256xbf16, #tpu.memory_space<vmem>>, vector<128x256xbf16>
    %cst = arith.constant dense<0.000000e+00> : vector<2x256xf32>
    %3 = tpu.matmul %1, %2, %cst {dimension_numbers = #tpu.dot_dimension_numbers<[1], [0], [0], [1], [0, 0, 1, 1], [], []>} : vector<2x128xbf16>, vector<128x256xbf16>, vector<2x256xf32> -> vector<2x256xf32>
    %c0_3 = arith.constant 0 : index
    %c0_4 = arith.constant 0 : index
    %4 = vector.load %arg3[%c0_3, %c0_4] : memref<1x256xf32, #tpu.memory_space<vmem>>, vector<1x256xf32>
    %5 = vector.broadcast %4 : vector<1x256xf32> to vector<2x256xf32>
    %6 = arith.addf %3, %5 : vector<2x256xf32>
    %c0_5 = arith.constant 0 : index
    %c0_6 = arith.constant 0 : index
    %7 = vector.load %arg4[%c0_5, %c0_6] : memref<1x128xf32, #tpu.memory_space<vmem>>, vector<1x128xf32>
    %8 = vector.shape_cast %7 : vector<1x128xf32> to vector<1x128xf32>
    %9 = vector.broadcast %8 : vector<1x128xf32> to vector<2x128xf32>
    %c0_7 = arith.constant 0 : index
    %c0_8 = arith.constant 0 : index
    %10 = vector.load %arg5[%c0_7, %c0_8] : memref<1x128xf32, #tpu.memory_space<vmem>>, vector<1x128xf32>
    %11 = vector.shape_cast %10 : vector<1x128xf32> to vector<1x128xf32>
    %12 = vector.broadcast %11 : vector<1x128xf32> to vector<2x128xf32>
    %13 = vector.extract_strided_slice %6 {offsets = [0, 0], sizes = [2, 128], strides = [1, 1]} : vector<2x256xf32> to vector<2x128xf32>
    %cst_9 = arith.constant dense<0.000000e+00> : vector<2xf32>
    %14 = vector.multi_reduction <add>, %13, %cst_9 [1] : vector<2x128xf32> to vector<2xf32>
    %15 = vector.shape_cast %14 : vector<2xf32> to vector<2x1xf32>
    %16 = arith.mulf %13, %13 : vector<2x128xf32>
    %cst_10 = arith.constant dense<0.000000e+00> : vector<2xf32>
    %17 = vector.multi_reduction <add>, %16, %cst_10 [1] : vector<2x128xf32> to vector<2xf32>
    %18 = vector.shape_cast %17 : vector<2xf32> to vector<2x1xf32>
    %cst_11 = arith.constant 7.812500e-03 : f32
    %19 = vector.broadcast %cst_11 : f32 to vector<2x1xf32>
    %20 = arith.mulf %15, %19 : vector<2x1xf32>
    %cst_12 = arith.constant 7.812500e-03 : f32
    %21 = vector.broadcast %cst_12 : f32 to vector<2x1xf32>
    %22 = arith.mulf %18, %21 : vector<2x1xf32>
    %23 = arith.mulf %20, %20 : vector<2x1xf32>
    %24 = arith.subf %22, %23 : vector<2x1xf32>
    %25 = vector.broadcast %20 : vector<2x1xf32> to vector<2x128xf32>
    %26 = arith.subf %13, %25 : vector<2x128xf32>
    %cst_13 = arith.constant 9.99999974E-6 : f32
    %27 = vector.broadcast %cst_13 : f32 to vector<2x1xf32>
    %28 = arith.addf %24, %27 : vector<2x1xf32>
    %29 = math.rsqrt %28 : vector<2x1xf32>
    %30 = vector.broadcast %29 : vector<2x1xf32> to vector<2x128xf32>
    %31 = arith.mulf %26, %30 : vector<2x128xf32>
    %32 = arith.mulf %31, %9 : vector<2x128xf32>
    %33 = arith.addf %32, %12 : vector<2x128xf32>
    %c0_14 = arith.constant 0 : index
    %c0_15 = arith.constant 0 : index
    %34 = vector.load %arg6[%c0_14, %c0_15] : memref<2x256xf32, #tpu.memory_space<vmem>>, vector<2x128xf32>
    tpu.vector_store %arg6[%c0_14, %c0_15], %33 {strides = array<i32>} : memref<2x256xf32, #tpu.memory_space<vmem>>, vector<2x128xf32>,
    %35 = vector.extract_strided_slice %6 {offsets = [0, 128], sizes = [2, 128], strides = [1, 1]} : vector<2x256xf32> to vector<2x128xf32>
    %cst_16 = arith.constant dense<0.000000e+00> : vector<2xf32>
    %36 = vector.multi_reduction <add>, %35, %cst_16 [1] : vector<2x128xf32> to vector<2xf32>
    %37 = vector.shape_cast %36 : vector<2xf32> to vector<2x1xf32>
    %38 = arith.mulf %35, %35 : vector<2x128xf32>
    %cst_17 = arith.constant dense<0.000000e+00> : vector<2xf32>
    %39 = vector.multi_reduction <add>, %38, %cst_17 [1] : vector<2x128xf32> to vector<2xf32>
    %40 = vector.shape_cast %39 : vector<2xf32> to vector<2x1xf32>
    %cst_18 = arith.constant 7.812500e-03 : f32
    %41 = vector.broadcast %cst_18 : f32 to vector<2x1xf32>
    %42 = arith.mulf %37, %41 : vector<2x1xf32>
    %cst_19 = arith.constant 7.812500e-03 : f32
    %43 = vector.broadcast %cst_19 : f32 to vector<2x1xf32>
    %44 = arith.mulf %40, %43 : vector<2x1xf32>
    %45 = arith.mulf %42, %42 : vector<2x1xf32>
    %46 = arith.subf %44, %45 : vector<2x1xf32>
    %47 = vector.broadcast %42 : vector<2x1xf32> to vector<2x128xf32>
    %48 = arith.subf %35, %47 : vector<2x128xf32>
    %cst_20 = arith.constant 9.99999974E-6 : f32
    %49 = vector.broadcast %cst_20 : f32 to vector<2x1xf32>
    %50 = arith.addf %46, %49 : vector<2x1xf32>
    %51 = math.rsqrt %50 : vector<2x1xf32>
    %52 = vector.broadcast %51 : vector<2x1xf32> to vector<2x128xf32>
    %53 = arith.mulf %48, %52 : vector<2x128xf32>
    %54 = arith.mulf %53, %9 : vector<2x128xf32>
    %55 = arith.addf %54, %12 : vector<2x128xf32>
    %c0_21 = arith.constant 0 : index
    %c128 = arith.constant 128 : index
    %56 = vector.load %arg6[%c0_21, %c128] : memref<2x256xf32, #tpu.memory_space<vmem>>, vector<2x128xf32>
    tpu.vector_store %arg6[%c0_21, %c128], %55 {strides = array<i32>} : memref<2x256xf32, #tpu.memory_space<vmem>>, vector<2x128xf32>,
    return
  }
  func.func @transform_0(%arg0: i32) -> (i32, i32) {
    %c0_i32 = arith.constant 0 : i32
    %c0_i32_0 = arith.constant 0 : i32
    %c0_i32_1 = arith.constant 0 : i32
    return %c0_i32, %c0_i32_0 : i32, i32
  }
  func.func @transform_1(%arg0: i32) -> (i32, i32) {
    %c0_i32 = arith.constant 0 : i32
    %c0_i32_0 = arith.constant 0 : i32
    return %c0_i32, %arg0 : i32, i32
  }
  func.func @transform_2(%arg0: i32) -> (i32, i32) {
    %c0_i32 = arith.constant 0 : i32
    %c0_i32_0 = arith.constant 0 : i32
    return %c0_i32, %arg0 : i32, i32
  }
  func.func @transform_3(%arg0: i32) -> (i32, i32) {
    %c0_i32 = arith.constant 0 : i32
    %c0_i32_0 = arith.constant 0 : i32
    %c0_i32_1 = arith.constant 0 : i32
    return %c0_i32, %c0_i32_0 : i32, i32
  }
  func.func @transform_4(%arg0: i32) -> (i32, i32) {
    %c0_i32 = arith.constant 0 : i32
    %c0_i32_0 = arith.constant 0 : i32
    %c0_i32_1 = arith.constant 0 : i32
    return %c0_i32, %c0_i32_0 : i32, i32
  }
  func.func @transform_5(%arg0: i32) -> (i32, i32) {
    %c0_i32 = arith.constant 0 : i32
    %c0_i32_0 = arith.constant 0 : i32
    return %c0_i32, %arg0 : i32, i32
  }
}

</mosaic_0001>

<llo_original>
// kernel: image_proj_model.1
$region0: #{image_proj_model.1}
  #allocation0 [shape = 'u32[]', space=smem, size = 0x4, offset = 0x4, fixed_abs, tag = 'smem constant byte address 0x4 - core index']
  #allocation1 [shape = 'u32[72,128]{1,0:T(1,128)}', space=vmem, size = 0x9000, scoped, tag = 'internal scratch']
  %s0 = inlined_call_operand.hbm [shape: f32[2,128], index: 0, kind: input, shape index: {}]
  %s1 = inlined_call_operand.hbm [shape: bf16[128,512], index: 1, kind: input, shape index: {}]
  %s2 = inlined_call_operand.hbm [shape: f32[1,512], index: 2, kind: input, shape index: {}]
  %s3 = inlined_call_operand.vmem [shape: f32[1,128], index: 3, kind: input, shape index: {}]
  %s4 = inlined_call_operand.vmem [shape: f32[1,128], index: 4, kind: input, shape index: {}]
  %s5 = inlined_call_operand.vmem [shape: f32[2,512], index: 5, kind: output, shape index: {}]
  %s6 = sld [smem:[#allocation0]]
  $region65: #{image_proj_model.1} parent=0
    _
  %s8 = ssub.s32 1, %s6
  %s9 = scalar_select 0, %s8, %s6
  $region1: #{image_proj_model.1} parent=0
    #allocation2 [shape = 'u8[1024]{0}', space=vmem, size = 0x400, scoped, tag = 'input window, operand 0, single buffered']
    #allocation3 [shape = 's32[2]{0}', space=sflag, size = 0x8, scoped, tag = 'scoped memory for image_proj_model.1']
    #allocation4 [shape = 'u8[131072]{0}', space=vmem, size = 0x20000, scoped, tag = 'input window, operand 1']
    #allocation5 [shape = 's32[2]{0}', space=sflag, size = 0x8, scoped, tag = 'scoped memory for image_proj_model.1']
    #allocation6 [shape = 'u8[2048]{0}', space=vmem, size = 0x800, scoped, tag = 'input window, operand 2']
    %10 = vsyncpa [#allocation3], 0
    %11 = vsyncpa [#allocation5], 0
    %s12 = scalar_lea.sflag [#allocation5], 1
    %13 = vsyncpa %s12, 0
    loop: start=0, step=1, limit=4
    $region2: #{image_proj_model.1} parent=1 // loop_pre_header
      _
    $region3: #{image_proj_model.1} parent=1 // loop_header
      %s15 = sphi 0, %s19
      %p16 = scmp.ge.s32.totalorder %s15, 4
      %s23 = sphi 0, %s23
      %s25 = sphi 0, %s23
      %s26 = sphi 0, %s25
      %s40 = sphi 0, %s26
      %s46 = sphi 0, %s48
      %s49 = sphi 0, %s46
      %s50 = sphi 0, %s49
      %s66 = sphi 0, %s50
      %s72 = sphi 0, %s74
      %s75 = sphi 0, %s72
      %s76 = sphi 0, %s75
      %s92 = sphi 0, %s76
      %s96 = sphi 0, %s96
      %s98 = sphi 0, %s96
      %s99 = sphi 0, %s98
      %s113 = sphi 0, %s99
      %s117 = sphi 0, %s117
      %s119 = sphi 0, %s117
      %s120 = sphi 0, %s119
      %s134 = sphi 0, %s120
      %s140 = sphi 0, %s142
      %s143 = sphi 0, %s140
      %s144 = sphi 0, %s143
      %s160 = sphi 0, %s144
    $region4: #{image_proj_model.1} parent=1 // loop_header_branch
      %18 = sbr.rel (%p16) target = $region8
    $region5: #{image_proj_model.1} parent=1 // loop_body
      %s20 = ssub.s32 %s15, 1
      %s21 = ssub.s32 %s15, 2
      %s22 = sadd.s32 %s15, 1
      %s24 = sadd.s32 %s23, 1
      %p27 = scmp.eq.s32.totalorder %s15, 1
      %p28 = scmp.ne.s32.totalorder %s23, %s25
      %p29 = scmp.eq.s32.totalorder %s15, 0
      %p30 = por %p28, %p29
      %p31 = scmp.ne.s32.totalorder %s23, %s25
      %p32 = scmp.eq.s32.totalorder %s20, 1
      %p33 = por %p31, %p32
      %p34 = scmp.ne.s32.totalorder %s25, %s26
      %p35 = scmp.eq.s32.totalorder %s20, 0
      %p36 = por %p34, %p35
      %p37 = scmp.ne.s32.totalorder %s25, %s26
      %p38 = scmp.eq.s32.totalorder %s21, 1
      %p39 = por %p37, %p38
      %p41 = scmp.ne.s32.totalorder %s26, %s40
      %p42 = scmp.eq.s32.totalorder %s21, 0
      %p43 = por %p41, %p42
      %s44 = ssub.s32 %s15, %s22
      %p45 = scmp.eq.s32.totalorder %s44, 0
      %s47 = sadd.s32 %s46, 1
      %s48 = scalar_select %p45, %s46, %s47
      %p51 = pneg %p45
      %p52 = scmp.eq.s32.totalorder %s15, 1
      %p53 = por %p51, %p52
      %p54 = scmp.ne.s32.totalorder %s46, %s49
      %p55 = scmp.eq.s32.totalorder %s15, 0
      %p56 = por %p54, %p55
      %p57 = scmp.ne.s32.totalorder %s46, %s49
      %p58 = scmp.eq.s32.totalorder %s20, 1
      %p59 = por %p57, %p58
      %p60 = scmp.ne.s32.totalorder %s49, %s50
      %p61 = scmp.eq.s32.totalorder %s20, 0
      %p62 = por %p60, %p61
      %p63 = scmp.ne.s32.totalorder %s49, %s50
      %p64 = scmp.eq.s32.totalorder %s21, 1
      %p65 = por %p63, %p64
      %p67 = scmp.ne.s32.totalorder %s50, %s66
      %p68 = scmp.eq.s32.totalorder %s21, 0
      %p69 = por %p67, %p68
      %s70 = ssub.s32 %s15, %s22
      %p71 = scmp.eq.s32.totalorder %s70, 0
      %s73 = sadd.s32 %s72, 1
      %s74 = scalar_select %p71, %s72, %s73
      %p77 = pneg %p71
      %p78 = scmp.eq.s32.totalorder %s15, 1
      %p79 = por %p77, %p78
      %p80 = scmp.ne.s32.totalorder %s72, %s75
      %p81 = scmp.eq.s32.totalorder %s15, 0
      %p82 = por %p80, %p81
      %p83 = scmp.ne.s32.totalorder %s72, %s75
      %p84 = scmp.eq.s32.totalorder %s20, 1
      %p85 = por %p83, %p84
      %p86 = scmp.ne.s32.totalorder %s75, %s76
      %p87 = scmp.eq.s32.totalorder %s20, 0
      %p88 = por %p86, %p87
      %p89 = scmp.ne.s32.totalorder %s75, %s76
      %p90 = scmp.eq.s32.totalorder %s21, 1
      %p91 = por %p89, %p90
      %p93 = scmp.ne.s32.totalorder %s76, %s92
      %p94 = scmp.eq.s32.totalorder %s21, 0
      %p95 = por %p93, %p94
      %s97 = sadd.s32 %s96, 1
      %p100 = scmp.eq.s32.totalorder %s15, 1
      %p101 = scmp.ne.s32.totalorder %s96, %s98
      %p102 = scmp.eq.s32.totalorder %s15, 0
      %p103 = por %p101, %p102
      %p104 = scmp.ne.s32.totalorder %s96, %s98
      %p105 = scmp.eq.s32.totalorder %s20, 1
      %p106 = por %p104, %p105
      %p107 = scmp.ne.s32.totalorder %s98, %s99
      %p108 = scmp.eq.s32.totalorder %s20, 0
      %p109 = por %p107, %p108
      %p110 = scmp.ne.s32.totalorder %s98, %s99
      %p111 = scmp.eq.s32.totalorder %s21, 1
      %p112 = por %p110, %p111
      %p114 = scmp.ne.s32.totalorder %s99, %s113
      %p115 = scmp.eq.s32.totalorder %s21, 0
      %p116 = por %p114, %p115
      %s118 = sadd.s32 %s117, 1
      %p121 = scmp.eq.s32.totalorder %s15, 1
      %p122 = scmp.ne.s32.totalorder %s117, %s119
      %p123 = scmp.eq.s32.totalorder %s15, 0
      %p124 = por %p122, %p123
      %p125 = scmp.ne.s32.totalorder %s117, %s119
      %p126 = scmp.eq.s32.totalorder %s20, 1
      %p127 = por %p125, %p126
      %p128 = scmp.ne.s32.totalorder %s119, %s120
      %p129 = scmp.eq.s32.totalorder %s20, 0
      %p130 = por %p128, %p129
      %p131 = scmp.ne.s32.totalorder %s119, %s120
      %p132 = scmp.eq.s32.totalorder %s21, 1
      %p133 = por %p131, %p132
      %p135 = scmp.ne.s32.totalorder %s120, %s134
      %p136 = scmp.eq.s32.totalorder %s21, 0
      %p137 = por %p135, %p136
      %s138 = ssub.s32 %s15, %s22
      %p139 = scmp.eq.s32.totalorder %s138, 0
      %s141 = sadd.s32 %s140, 1
      %s142 = scalar_select %p139, %s140, %s141
      %p145 = pneg %p139
      %p146 = scmp.eq.s32.totalorder %s15, 1
      %p147 = por %p145, %p146
      %p148 = scmp.ne.s32.totalorder %s140, %s143
      %p149 = scmp.eq.s32.totalorder %s15, 0
      %p150 = por %p148, %p149
      %p151 = scmp.ne.s32.totalorder %s140, %s143
      %p152 = scmp.eq.s32.totalorder %s20, 1
      %p153 = por %p151, %p152
      %p154 = scmp.ne.s32.totalorder %s143, %s144
      %p155 = scmp.eq.s32.totalorder %s20, 0
      %p156 = por %p154, %p155
      %p157 = scmp.ne.s32.totalorder %s143, %s144
      %p158 = scmp.eq.s32.totalorder %s21, 1
      %p159 = por %p157, %p158
      %p161 = scmp.ne.s32.totalorder %s144, %s160
      %p162 = scmp.eq.s32.totalorder %s21, 0
      %p163 = por %p161, %p162
      %p164 = scmp.le.s32.totalorder 1, %s15
      %p165 = scmp.lt.s32.totalorder %s15, 3
      %p166 = pnand %p164, %p165
      %p167 = pneg %p166
      // Predicated region
      $region9: #{image_proj_model.1} parent=5 // pred_check
        _
      $region10: #{image_proj_model.1} parent=5 // pred_check_branch
        %169 = sbr.rel (%p166) target = $region12
      $region11: #{image_proj_model.1} parent=5 // pred_region
        %s170 = ssub.s32 %s15, 1
        // Predicated region
        $region13: #{image_proj_model.1} parent=11 // pred_check
          %p171 = pneg %p36
        $region14: #{image_proj_model.1} parent=11 // pred_check_branch
          %173 = sbr.rel (%p171) target = $region16
        $region15: #{image_proj_model.1} parent=11 // pred_region
          %175 = vsyncadd [#allocation3], 0
          %s177 = sshll.u32 %s0, 4
          %s178 = int_to_ptr.hbm [resolvable:$true] %s177
          %s179 = sshll.u32 [#allocation2], 4
          %s180 = int_to_ptr.vmem [resolvable:$true] %s179
          %182 = dma.hbm_to_vmem [thread:$0]  %s178, 32, %s180, [#allocation3]
        $region16: #{image_proj_model.1} parent=11 // pred_fallthru
          _
        // Predicated region
        $region17: #{image_proj_model.1} parent=11 // pred_check
          %p183 = pneg %p109
        $region18: #{image_proj_model.1} parent=11 // pred_check_branch
          %185 = sbr.rel (%p183) target = $region20
        $region19: #{image_proj_model.1} parent=11 // pred_region
          _
        $region20: #{image_proj_model.1} parent=11 // pred_fallthru
          _
        // Predicated region
        $region21: #{image_proj_model.1} parent=11 // pred_check
          %p186 = pneg %p130
        $region22: #{image_proj_model.1} parent=11 // pred_check_branch
          %188 = sbr.rel (%p186) target = $region24
        $region23: #{image_proj_model.1} parent=11 // pred_region
          _
        $region24: #{image_proj_model.1} parent=11 // pred_fallthru
          _
      $region12: #{image_proj_model.1} parent=5 // pred_fallthru
        _
      %p189 = scmp.lt.s32.totalorder %s15, 2
      // Predicated region
      $region25: #{image_proj_model.1} parent=5 // pred_check
        %p190 = pneg %p189
      $region26: #{image_proj_model.1} parent=5 // pred_check_branch
        %192 = sbr.rel (%p190) target = $region28
      $region27: #{image_proj_model.1} parent=5 // pred_region
        // Predicated region
        $region29: #{image_proj_model.1} parent=27 // pred_check
          %p193 = pneg %p56
        $region30: #{image_proj_model.1} parent=27 // pred_check_branch
          %195 = sbr.rel (%p193) target = $region32
        $region31: #{image_proj_model.1} parent=27 // pred_region
          %s196 = sand.u32 %s15, 1
          %s197 = scalar_lea.sflag [#allocation5], %s196
          %s198 = sand.u32 %s46, 1
          %s199 = smul.addr %s198, 128
          %s200 = scalar_lea.vmem [#allocation4], %s199
          %s201 = smul.u32 2, %s15
          %203 = vsyncadd %s197, 0
          %s204 = smul.addr %s201, 4
          %s205 = scalar_lea.hbm %s1, %s204
          %s206 = sshll.u32 %s205, 4
          %s207 = int_to_ptr.hbm [resolvable:$true] %s206
          %s208 = sshll.u32 %s200, 4
          %s209 = int_to_ptr.vmem [resolvable:$true] %s208
          %214 = dma.hbm_to_vmem [thread:$0]  %s207, 2048, %s209, %s197, 256, 128, 8
        $region32: #{image_proj_model.1} parent=27 // pred_fallthru
          _
        // Predicated region
        $region33: #{image_proj_model.1} parent=27 // pred_check
          %p215 = pneg %p82
        $region34: #{image_proj_model.1} parent=27 // pred_check_branch
          %217 = sbr.rel (%p215) target = $region36
        $region35: #{image_proj_model.1} parent=27 // pred_region
          %s218 = sand.u32 %s15, 1
          %s219 = scalar_lea.sflag [#allocation5], %s218
          %s220 = sand.u32 %s72, 1
          %s221 = smul.addr %s220, 2
          %s222 = scalar_lea.vmem [#allocation6], %s221
          %s223 = smul.u32 2, %s15
          %225 = vsyncadd %s219, 0
          %s226 = scalar_lea.hbm %s2, %s223
          %s228 = sshll.u32 %s226, 4
          %s229 = int_to_ptr.hbm [resolvable:$true] %s228
          %s230 = sshll.u32 %s222, 4
          %s231 = int_to_ptr.vmem [resolvable:$true] %s230
          %233 = dma.hbm_to_vmem [thread:$0]  %s229, 32, %s231, %s219
        $region36: #{image_proj_model.1} parent=27 // pred_fallthru
          _
      $region28: #{image_proj_model.1} parent=5 // pred_fallthru
        _
      %p234 = scmp.le.s32.totalorder 1, %s15
      %p235 = scmp.lt.s32.totalorder %s15, 3
      %p236 = pnand %p234, %p235
      %p237 = pneg %p236
      // Predicated region
      $region37: #{image_proj_model.1} parent=5 // pred_check
        _
      $region38: #{image_proj_model.1} parent=5 // pred_check_branch
        %239 = sbr.rel (%p236) target = $region40
      $region39: #{image_proj_model.1} parent=5 // pred_region
        %s240 = ssub.s32 %s15, 1
        // Predicated region
        $region41: #{image_proj_model.1} parent=39 // pred_check
          %p241 = pneg %p36
        $region42: #{image_proj_model.1} parent=39 // pred_check_branch
          %243 = sbr.rel (%p241) target = $region44
        $region43: #{image_proj_model.1} parent=39 // pred_region
          %245 = dma.done [#allocation3], 32
        $region44: #{image_proj_model.1} parent=39 // pred_fallthru
          _
        %s246 = sand.u32 %s20, 1
        %s247 = scalar_lea.sflag [#allocation5], %s246
        %s248 = sand.u32 %s49, 1
        %s249 = smul.addr %s248, 128
        %s250 = scalar_lea.vmem [#allocation4], %s249
        // Predicated region
        $region45: #{image_proj_model.1} parent=39 // pred_check
          %p251 = pneg %p62
        $region46: #{image_proj_model.1} parent=39 // pred_check_branch
          %253 = sbr.rel (%p251) target = $region48
        $region47: #{image_proj_model.1} parent=39 // pred_region
          %255 = dma.done %s247, 2048
        $region48: #{image_proj_model.1} parent=39 // pred_fallthru
          _
        %s256 = sand.u32 %s20, 1
        %s257 = scalar_lea.sflag [#allocation5], %s256
        %s258 = sand.u32 %s75, 1
        %s259 = smul.addr %s258, 2
        %s260 = scalar_lea.vmem [#allocation6], %s259
        // Predicated region
        $region49: #{image_proj_model.1} parent=39 // pred_check
          %p261 = pneg %p88
        $region50: #{image_proj_model.1} parent=39 // pred_check_branch
          %263 = sbr.rel (%p261) target = $region52
        $region51: #{image_proj_model.1} parent=39 // pred_region
          %265 = dma.done %s257, 32
        $region52: #{image_proj_model.1} parent=39 // pred_fallthru
          _
        %p266 = pneg %p36
        %p267 = pneg %p33
        %s268 = sand.u32 %s20, 1
        %s269 = scalar_lea.sflag [#allocation5], %s268
        %s270 = sand.u32 %s49, 1
        %s271 = smul.addr %s270, 128
        %s272 = scalar_lea.vmem [#allocation4], %s271
        %p273 = pneg %p62
        %p274 = pneg %p59
        %s275 = sand.u32 %s20, 1
        %s276 = scalar_lea.sflag [#allocation5], %s275
        %s277 = sand.u32 %s75, 1
        %s278 = smul.addr %s277, 2
        %s279 = scalar_lea.vmem [#allocation6], %s278
        %p280 = pneg %p88
        %p281 = pneg %p85
        %p282 = pneg %p109
        %p283 = pneg %p106
        %p284 = pneg %p130
        %p285 = pneg %p127
        %p286 = pneg %p156
        %p287 = pneg %p153
        %s288 = smul.u32 2, %s20
        %p289 = scmp.lt.s32.totalorder %s288, 3
        %s290 = scalar_select %p289, %s288, 3
        %s291 = smul.addr %s290, 2
        %s292 = scalar_lea.vmem %s5, %s291
        %s293 = smul.u32 2, %s20
        %s294 = smul.u32 2, %s20
        %s295 = smul.u32 2, %s20
        %p296 = scmp.lt.s32.totalorder %s295, 3
        %s297 = scalar_select %p296, %s295, 3
        %s298 = smul.addr %s297, 2
        %s299 = scalar_lea.vmem %s5, %s298
        %s300 = smul.u32 2, %s20
        %v301 = vld [vmem:[#allocation2] sm:$0x3]
        %v302 = vpack.c.bf16 %v301, %v301
        %v303 = vld [vmem:[%s250] sm:$0xff]
        %v304 = vld [vmem:[%s250 + $0x8] sm:$0xff]
        %v305 = vld [vmem:[%s250 + $0x10] sm:$0xff]
        %v306 = vld [vmem:[%s250 + $0x18] sm:$0xff]
        %v307 = vld [vmem:[%s250 + $0x20] sm:$0xff]
        %v308 = vld [vmem:[%s250 + $0x28] sm:$0xff]
        %v309 = vld [vmem:[%s250 + $0x30] sm:$0xff]
        %v310 = vld [vmem:[%s250 + $0x38] sm:$0xff]
        %v311 = vld [vmem:[%s250 + $0x40] sm:$0xff]
        %v312 = vld [vmem:[%s250 + $0x48] sm:$0xff]
        %v313 = vld [vmem:[%s250 + $0x50] sm:$0xff]
        %v314 = vld [vmem:[%s250 + $0x58] sm:$0xff]
        %v315 = vld [vmem:[%s250 + $0x60] sm:$0xff]
        %v316 = vld [vmem:[%s250 + $0x68] sm:$0xff]
        %v317 = vld [vmem:[%s250 + $0x70] sm:$0xff]
        %v318 = vld [vmem:[%s250 + $0x78] sm:$0xff]
        %v319 = vld [vmem:[%s260] sm:$0x3]
        %v321 = vperm.slane %v319, 0
        %v322 = vperm.slane %v319, 1
        %v341 = vunpack.c.l.b16 %v303
        %v342 = vunpack.c.h.b16 %v303
        %v343 = vunpack.c.l.b16 %v304
        %v344 = vunpack.c.h.b16 %v304
        %v345 = vunpack.c.l.b16 %v305
        %v346 = vunpack.c.h.b16 %v305
        %v347 = vunpack.c.l.b16 %v306
        %v348 = vunpack.c.h.b16 %v306
        %v349 = vunpack.c.l.b16 %v307
        %v350 = vunpack.c.h.b16 %v307
        %v351 = vunpack.c.l.b16 %v308
        %v352 = vunpack.c.h.b16 %v308
        %v353 = vunpack.c.l.b16 %v309
        %v354 = vunpack.c.h.b16 %v309
        %v355 = vunpack.c.l.b16 %v310
        %v356 = vunpack.c.h.b16 %v310
        %v357 = vunpack.c.l.b16 %v311
        %v358 = vunpack.c.h.b16 %v311
        %v359 = vunpack.c.l.b16 %v312
        %v360 = vunpack.c.h.b16 %v312
        %v361 = vunpack.c.l.b16 %v313
        %v362 = vunpack.c.h.b16 %v313
        %v363 = vunpack.c.l.b16 %v314
        %v364 = vunpack.c.h.b16 %v314
        %v365 = vunpack.c.l.b16 %v315
        %v366 = vunpack.c.h.b16 %v315
        %v367 = vunpack.c.l.b16 %v316
        %v368 = vunpack.c.h.b16 %v316
        %v369 = vunpack.c.l.b16 %v317
        %v370 = vunpack.c.h.b16 %v317
        %v371 = vunpack.c.l.b16 %v318
        %v372 = vunpack.c.h.b16 %v318
        %v373 = vpack.c.b16 %v343, %v341
        %v374 = vpack.c.b16 %v344, %v342
        %v375 = vpack.c.b16 %v347, %v345
        %v376 = vpack.c.b16 %v348, %v346
        %v377 = vpack.c.b16 %v351, %v349
        %v378 = vpack.c.b16 %v352, %v350
        %v379 = vpack.c.b16 %v355, %v353
        %v380 = vpack.c.b16 %v356, %v354
        %v381 = vpack.c.b16 %v359, %v357
        %v382 = vpack.c.b16 %v360, %v358
        %v383 = vpack.c.b16 %v363, %v361
        %v384 = vpack.c.b16 %v364, %v362
        %v385 = vpack.c.b16 %v367, %v365
        %v386 = vpack.c.b16 %v368, %v366
        %v387 = vpack.c.b16 %v371, %v369
        %v388 = vpack.c.b16 %v372, %v370
        %405 = vmatpush.bf16.msra.mxu0 %v387
        %406 = vmatpush.bf16.msra.mxu0 %v385
        %407 = vmatpush.bf16.msra.mxu0 %v383
        %408 = vmatpush.bf16.msra.mxu0 %v381
        %409 = vmatpush.bf16.msra.mxu0 %v379
        %410 = vmatpush.bf16.msra.mxu0 %v377
        %411 = vmatpush.bf16.msra.mxu0 %v375
        %412 = vmatpush.bf16.msra.mxu0 %v373
        %413 = vmatmul.bf16.gmra.mxu0 %v302
        %v414 = vpop.f32.mrf.mxu0
        %v415 = vadd.f32 %v321, %v414
        %v416 = vpop.f32.mrf.mxu0
        %417 = vdwg.mxu0
        %418 = vmatpush.bf16.msra.mxu0 %v388
        %419 = vmatpush.bf16.msra.mxu0 %v386
        %420 = vmatpush.bf16.msra.mxu0 %v384
        %421 = vmatpush.bf16.msra.mxu0 %v382
        %422 = vmatpush.bf16.msra.mxu0 %v380
        %423 = vmatpush.bf16.msra.mxu0 %v378
        %424 = vmatpush.bf16.msra.mxu0 %v376
        %425 = vmatpush.bf16.msra.mxu0 %v374
        %426 = vmatmul.bf16.gmra.mxu0 %v302
        %v427 = vpop.f32.mrf.mxu0
        %v428 = vadd.f32 %v322, %v427
        %v429 = vpop.f32.mrf.mxu0
        %430 = vdwg.mxu0
        %v431 = vld [vmem:[%s3] sm:$0x1]
        %v433 = vperm.slane %v431, 0
        %v435 = vld [vmem:[%s4] sm:$0x1]
        %v437 = vperm.slane %v435, 0
        %vm439 = vcmask 1041408
        %v440 = vsel %vm439, %v415, 0.0
        %441 = vadd.xlane.f32.xlu0 %v440
        %v442 = vpop.xlane.xlu0 %441
        %v443 = vmul.f32 %v415, %v415
        %v444 = vsel %vm439, %v443, 0.0
        %445 = vadd.xlane.f32.xlu0 %v444
        %v446 = vpop.xlane.xlu0 %445
        %v447 = vmul.f32 %v442, 0.0078125
        %v448 = vmul.f32 %v446, 0.0078125
        %v449 = vmul.f32 %v447, %v447
        %v450 = vsub.f32 %v448, %v449
        %v451 = vsub.f32 %v415, %v447
        %v452 = vadd.f32 %v450, 1e-05
        %v453 = vrsqrt.pop %v452
        %v454 = vmul.f32 %v453, %v452
        %v455 = vmul.f32 %v454, %v453
        %v456 = vmul.f32 0.5, %v455
        %v457 = vsub.f32 1.5, %v456
        %v458 = vmul.f32 %v453, %v457
        %vm459 = vweird.f32 %v452
        %vm460 = vweird.f32 %v453
        %vm461 = vmor %vm459, %vm460
        %v462 = vsel %vm461, %v453, %v458
        %v463 = vmul.f32 %v451, %v462
        %v464 = vmul.f32 %v463, %v433
        %v465 = vadd.f32 %v464, %v437
        %466 = vst [vmem:[%s299] sm:$0x3] %v465
        %v467 = vsel %vm439, %v428, 0.0
        %468 = vadd.xlane.f32.xlu0 %v467
        %v469 = vpop.xlane.xlu0 %468
        %v470 = vmul.f32 %v428, %v428
        %v471 = vsel %vm439, %v470, 0.0
        %472 = vadd.xlane.f32.xlu0 %v471
        %v473 = vpop.xlane.xlu0 %472
        %v474 = vmul.f32 %v469, 0.0078125
        %v475 = vmul.f32 %v473, 0.0078125
        %v476 = vmul.f32 %v474, %v474
        %v477 = vsub.f32 %v475, %v476
        %v478 = vsub.f32 %v428, %v474
        %v479 = vadd.f32 %v477, 1e-05
        %v480 = vrsqrt.pop %v479
        %v481 = vmul.f32 %v480, %v479
        %v482 = vmul.f32 %v481, %v480
        %v483 = vmul.f32 0.5, %v482
        %v484 = vsub.f32 1.5, %v483
        %v485 = vmul.f32 %v480, %v484
        %vm486 = vweird.f32 %v479
        %vm487 = vweird.f32 %v480
        %vm488 = vmor %vm486, %vm487
        %v489 = vsel %vm488, %v480, %v485
        %v490 = vmul.f32 %v478, %v489
        %v491 = vmul.f32 %v490, %v433
        %v492 = vadd.f32 %v491, %v437
        %493 = vst [vmem:[%s299 + $0x2] sm:$0x3] %v492
        %s494 = smul.u32 2, %s20
        %p495 = scmp.lt.s32.totalorder %s494, 3
        %s496 = scalar_select %p495, %s494, 3
        %s497 = smul.addr %s496, 2
        %s498 = scalar_lea.vmem %s5, %s497
        // Predicated region
        $region53: #{image_proj_model.1} parent=39 // pred_check
          %p499 = pneg %p153
        $region54: #{image_proj_model.1} parent=39 // pred_check_branch
          %501 = sbr.rel (%p499) target = $region56
        $region55: #{image_proj_model.1} parent=39 // pred_region
          %s502 = smul.u32 2, %s20
        $region56: #{image_proj_model.1} parent=39 // pred_fallthru
          _
      $region40: #{image_proj_model.1} parent=5 // pred_fallthru
        _
      %p503 = scmp.le.s32.totalorder 2, %s15
      // Predicated region
      $region57: #{image_proj_model.1} parent=5 // pred_check
        %p504 = pneg %p503
      $region58: #{image_proj_model.1} parent=5 // pred_check_branch
        %506 = sbr.rel (%p504) target = $region60
      $region59: #{image_proj_model.1} parent=5 // pred_region
        %s507 = ssub.s32 %s15, 2
        // Predicated region
        $region61: #{image_proj_model.1} parent=59 // pred_check
          %p508 = pneg %p159
        $region62: #{image_proj_model.1} parent=59 // pred_check_branch
          %510 = sbr.rel (%p508) target = $region64
        $region63: #{image_proj_model.1} parent=59 // pred_region
          %s511 = smul.u32 2, %s21
          %p512 = scmp.lt.s32.totalorder %s511, 3
          %s513 = scalar_select %p512, %s511, 3
          %s514 = smul.addr %s513, 2
          %s515 = scalar_lea.vmem %s5, %s514
        $region64: #{image_proj_model.1} parent=59 // pred_fallthru
          _
      $region60: #{image_proj_model.1} parent=5 // pred_fallthru
        _
    $region6: #{image_proj_model.1} parent=1 // loop_footer
      %s19 = sadd.s32 1, %s15
    $region7: #{image_proj_model.1} parent=1 // loop_footer_branch
      %14 = sbr.rel target = $region3
    $region8: #{image_proj_model.1} parent=1 // loop_exit
      _
    %516 = vsyncpa [#allocation3], 1
    %s517 = scalar_lea.sflag [#allocation3], 1
    %518 = vsyncpa %s517, 1
    %519 = vsyncpa [#allocation5], 1
    %s520 = scalar_lea.sflag [#allocation5], 1
    %521 = vsyncpa %s520, 1

</llo_original>
